<compile_context>
chip_gen: v6e
topology: v6e:2x2x1
jax: 0.10.0
libtpu: 0.0.40
codegen_flags: <defaults>
</compile_context>

<pallas_src>
import functools

import numpy as np
import jax
import jax.numpy as jnp
from jax import lax
from jax.experimental import pallas as pl
from jax.experimental.pallas import tpu as pltpu

N_FILTERS = 1
IN_SCALE = 3
N_HIDDEN = 5
BN_EPS = 1e-5
FC_IN = 350   # hard-coded by nn.Linear(350, n_hidden) in the module
KH, KW = 3, 5
N_TAPS = KH * KW


def _round_up(a, b):
    return (a + b - 1) // b * b


@functools.lru_cache(maxsize=None)
def _roll_matches_np() -> bool:
    """One-time probe of pltpu.roll's shift convention (version-proof).

    Returns True if pltpu.roll(x, s)[i] == x[(i - s) % n]  (np.roll convention).
    """
    n = 128
    x = jnp.tile(jnp.arange(n, dtype=jnp.float32)[None, :], (8, 1))

    def _probe(x_ref, o_ref):
        o_ref[...] = pltpu.roll(x_ref[...], 1, axis=1)

    y = pl.pallas_call(_probe,
                       out_shape=jax.ShapeDtypeStruct((8, n), jnp.float32))(x)
    return float(np.asarray(jax.block_until_ready(y))[0, 0]) == float(n - 1)


# ------------------------------ fused kernel --------------------------------
def _net_kernel(xp_ref, w0_ref, sh0_ref, w1f_ref, bf_ref,
                w1p_ref, b1_ref, w2_ref, b2_ref, out_ref, *, C, tap_shifts):
    """Fused conv-head + FC on one batch block.

    xp_ref  : (BN, LP)   f32 VMEM  flat row-major zero-padded images
    w0_ref  : (C*15,)    f32 SMEM  conv0 weights with BN scale folded in
    sh0_ref : (C,)       f32 SMEM  folded conv0 bias + BN shift
    w1f_ref : (C,)       f32 SMEM  1x1 conv weights with BN scale folded in
    bf_ref  : (1,)       f32 SMEM  folded 1x1 conv bias + BN shift
    w1p_ref : (LP, NH)   f32 VMEM  fc1 weight scattered to flat-padded positions
    b1_ref  : (1, NH)    f32 VMEM
    w2_ref  : (NH, O)    f32 VMEM
    b2_ref  : (1, O)     f32 VMEM
    out_ref : (BN, O)    f32 VMEM
    """
    xp = xp_ref[...]                                      # (BN, LP), lane-dense

    # conv(1->C,(3,5),pad=(1,2)): tap-outermost so each lane shift (XLU roll)
    # is shared by all C channel FMAs (VALU); C accumulators stay in vregs.
    accs = [None] * C
    for t, s in enumerate(tap_shifts):                    # t = kh*KW + kw
        xs = xp if s == 0 else pltpu.roll(xp, s, axis=1)  # xs[:, j] == xp[:, j + off_t]
        for c in range(C):
            term = w0_ref[c * N_TAPS + t] * xs
            accs[c] = term if accs[c] is None else accs[c] + term

    # Per-channel bias/BN shift + ReLU, then folded 1x1 conv (C -> 1) + ReLU.
    feat = jnp.full(xp.shape, bf_ref[0], dtype=jnp.float32)
    for c in range(C):
        feat = feat + w1f_ref[c] * jnp.maximum(accs[c] + sh0_ref[c], 0.0)
    feat = jnp.maximum(feat, 0.0)                         # garbage lanes killed by w1p zeros

    # fc1: ONE MXU matmul; every pad / wraparound lane hits an all-zero weight row.
    acc1 = jnp.dot(feat, w1p_ref[...], preferred_element_type=jnp.float32)
    # TODO(synk): nn.Dropout(0.5) is identity in eval mode; training-mode
    # stochastic masking (and batch-stats BatchNorm) are intentionally omitted.
    h1 = jnp.maximum(acc1 + b1_ref[...], 0.0)
    out_ref[...] = jnp.dot(h1, w2_ref[...],
                           preferred_element_type=jnp.float32) + b2_ref[...]


# ------------------------------ wrapper --------------------------------------
def net_forward(x, params, *, block_n=256):
    """x: (N, 1, H, W) float32, NCHW (PyTorch convention). Returns (N, output_size)."""
    N, Cin, H, W = x.shape
    assert Cin == 1 and H * W == FC_IN
    C = IN_SCALE * N_FILTERS
    W4, Hp = W + 4, H + 2
    L = Hp * W4                       # flat length of the zero-padded image (464)
    LP = _round_up(L, 128)            # lane-pad to whole vregs (512)

    # Roll amounts: need xs[:, j] == xp[:, j + off] with off = kh*W4 + kw.
    np_roll = _roll_matches_np()
    tap_shifts = []
    for kh in range(KH):
        for kw in range(KW):
            off = kh * W4 + kw
            tap_shifts.append(0 if off == 0 else (LP - off if np_roll else off))
    tap_shifts = tuple(tap_shifts)

    # Fold conv0 bias + BatchNorm(eval) into the weights / a per-channel shift.
    s0 = params["bn0_gamma"] / jnp.sqrt(params["bn0_var"] + BN_EPS)
    t0 = params["bn0_beta"] - params["bn0_mean"] * s0
    w0_folded = (params["conv0_w"] * s0[:, None, None, None]).reshape(-1)   # (C*15,)
    shift0 = params["conv0_b"] * s0 + t0                                    # (C,)

    # Fold 1x1-conv bias + BatchNorm(eval).
    s1 = params["bn1_gamma"] / jnp.sqrt(params["bn1_var"] + BN_EPS)
    t1 = params["bn1_beta"] - params["bn1_mean"] * s1
    w1f = params["conv1_w"].reshape(C) * s1[0]                              # (C,)
    bf = (params["conv1_b"] * s1 + t1).reshape(1)                           # (1,)

    # fc1 weight scattered into flat-padded positions: row h*W4+w <- fc1_w[h*W+w, :];
    # every pad / junk flat position gets an all-zero row (correctness of the
    # flat-layout conv relies on exactly this).
    NH = params["fc1_w"].shape[1]
    out_size = params["fc2_w"].shape[1]
    w1_pad = jnp.pad(params["fc1_w"].reshape(H, W, NH),
                     ((0, 0), (0, W4 - W), (0, 0))).reshape(H * W4, NH)
    w1_pad = jnp.pad(w1_pad, ((0, LP - H * W4), (0, 0)))                    # (LP, NH)

    # Batch tiling: multiple of 8 sublanes, pipelined + megacore-parallel grid.
    bn = min(block_n, _round_up(N, 8))
    n_pad = _round_up(N, bn)

    # Glue: zero-pad H/W, flatten row-major, pad lanes & batch. No transpose.
    xflat = jnp.pad(x[:, 0], ((0, 0), (1, 1), (2, 2))).reshape(N, L)
    xflat = jnp.pad(xflat, ((0, n_pad - N), (0, LP - L)))                   # (n_pad, LP)

    smem = pl.BlockSpec(memory_space=pltpu.MemorySpace.SMEM)

    out = pl.pallas_call(
        functools.partial(_net_kernel, C=C, tap_shifts=tap_shifts),
        out_shape=jax.ShapeDtypeStruct((n_pad, out_size), jnp.float32),
        grid=(n_pad // bn,),
        in_specs=[
            pl.BlockSpec((bn, LP), lambda i: (i, 0)),         # batch block of flat images
            smem, smem, smem, smem,                           # folded conv scalars
            pl.BlockSpec((LP, NH), lambda i: (0, 0)),         # fc1 weight (resident)
            pl.BlockSpec((1, NH), lambda i: (0, 0)),
            pl.BlockSpec((NH, out_size), lambda i: (0, 0)),
            pl.BlockSpec((1, out_size), lambda i: (0, 0)),
        ],
        out_specs=pl.BlockSpec((bn, out_size), lambda i: (i, 0)),
        compiler_params=pltpu.CompilerParams(
            dimension_semantics=("parallel",)),
    )(xflat,
      w0_folded.astype(jnp.float32), shift0.astype(jnp.float32),
      w1f.astype(jnp.float32), bf.astype(jnp.float32),
      w1_pad, params["fc1_b"].reshape(1, -1),
      params["fc2_w"], params["fc2_b"].reshape(1, -1))
    return out[:N]


# --------------------------- pure-JAX reference ------------------------------
def net_forward_ref(x, params):
    y = lax.conv_general_dilated(
        x, params["conv0_w"], window_strides=(1, 1),
        padding=((1, 1), (2, 2)),
        dimension_numbers=("NCHW", "OIHW", "NCHW"))
    y = y + params["conv0_b"].reshape(1, -1, 1, 1)
    s0 = params["bn0_gamma"] / jnp.sqrt(params["bn0_var"] + BN_EPS)
    t0 = params["bn0_beta"] - params["bn0_mean"] * s0
    y = jnp.maximum(y * s0.reshape(1, -1, 1, 1) + t0.reshape(1, -1, 1, 1), 0.0)

    z = jnp.einsum("nchw,oc->nohw", y, params["conv1_w"][:, :, 0, 0])
    z = z + params["conv1_b"].reshape(1, -1, 1, 1)
    s1 = params["bn1_gamma"] / jnp.sqrt(params["bn1_var"] + BN_EPS)
    t1 = params["bn1_beta"] - params["bn1_mean"] * s1
    z = jnp.maximum(z * s1.reshape(1, -1, 1, 1) + t1.reshape(1, -1, 1, 1), 0.0)

    flat = z.reshape(x.shape[0], -1)
    h = jnp.maximum(flat @ params["fc1_w"] + params["fc1_b"], 0.0)
    return h @ params["fc2_w"] + params["fc2_b"]


# ------------------------------ params --------------------------------------
def init_params(key, n_classes=3):
    output_size = 1 if n_classes == 2 else n_classes
    C = IN_SCALE * N_FILTERS
    ks = jax.random.split(key, 12)
    p = {}
    p["conv0_w"] = 0.2 * jax.random.normal(ks[0], (C, 1, 3, 5), jnp.float32)
    p["conv0_b"] = 0.1 * jax.random.normal(ks[1], (C,), jnp.float32)
    p["bn0_gamma"] = 1.0 + 0.1 * jax.random.normal(ks[2], (C,), jnp.float32)
    p["bn0_beta"] = 0.1 * jax.random.normal(ks[3], (C,), jnp.float32)
    p["bn0_mean"] = 0.05 * jax.random.normal(ks[4], (C,), jnp.float32)
    p["bn0_var"] = 1.0 + 0.1 * jnp.abs(jax.random.normal(ks[5], (C,), jnp.float32))
    p["conv1_w"] = 0.3 * jax.random.normal(ks[6], (1, C, 1, 1), jnp.float32)
    p["conv1_b"] = 0.1 * jax.random.normal(ks[7], (1,), jnp.float32)
    p["bn1_gamma"] = jnp.ones((1,), jnp.float32)
    p["bn1_beta"] = jnp.zeros((1,), jnp.float32)
    p["bn1_mean"] = jnp.zeros((1,), jnp.float32)
    p["bn1_var"] = jnp.ones((1,), jnp.float32)
    p["fc1_w"] = 0.05 * jax.random.normal(ks[8], (FC_IN, N_HIDDEN), jnp.float32)
    p["fc1_b"] = 0.1 * jax.random.normal(ks[9], (N_HIDDEN,), jnp.float32)
    p["fc2_w"] = 0.2 * jax.random.normal(ks[10], (N_HIDDEN, output_size), jnp.float32)
    p["fc2_b"] = 0.1 * jax.random.normal(ks[11], (output_size,), jnp.float32)
    return p


if __name__ == "__main__":
    key = jax.random.PRNGKey(0)
    kx, kp = jax.random.split(key)

    # Linear(350, 5) forces H*W == 350 after the channel-preserving convs.
    N, H, W = 2, 14, 25
    n_classes = 3  # -> output_size = 3

    x = jax.random.normal(kx, (N, 1, H, W), dtype=jnp.float32)
    params = init_params(kp, n_classes=n_classes)

    _roll_matches_np()               # prime the one-time roll-convention probe
    net_fwd = jax.jit(net_forward)   # fuse the host-side folding / pad glue
    out = jax.block_until_ready(net_fwd(x, params))
    ref = net_forward_ref(x, params)

    assert out.shape == (N, n_classes), out.shape
    np.testing.assert_allclose(np.asarray(out), np.asarray(ref),
                               rtol=1e-4, atol=1e-4)
    print("KERNEL_OK")
</pallas_src>

<mosaic_0001>
module attributes {stable_mosaic.version = 11 : i64} {
  func.func @_probe(%arg0: memref<8x128xf32, #tpu.memory_space<vmem>>, %arg1: memref<8x128xf32, #tpu.memory_space<vmem>>) attributes {dimension_semantics = [], scalar_prefetch = 0 : i64, scratch_operands = 0 : i64, tpu.core_type = #tpu.core_type<tc>} {
    %c0 = arith.constant 0 : index
    %c0_0 = arith.constant 0 : index
    %0 = vector.load %arg0[%c0, %c0_0] : memref<8x128xf32, #tpu.memory_space<vmem>>, vector<8x128xf32>
    %c1_i32 = arith.constant 1 : i32
    %1 = tpu.dynamic_rotate %0 by %c1_i32 dim 1 : vector<8x128xf32>, i32 -> vector<8x128xf32>
    %c0_1 = arith.constant 0 : index
    %c0_2 = arith.constant 0 : index
    %2 = vector.load %arg1[%c0_1, %c0_2] : memref<8x128xf32, #tpu.memory_space<vmem>>, vector<8x128xf32>
    tpu.vector_store %arg1[%c0_1, %c0_2], %1 {strides = array<i32>} : memref<8x128xf32, #tpu.memory_space<vmem>>, vector<8x128xf32>,
    return
  }
}

</mosaic_0001>

<llo_original>
// kernel: tpu_custom_call.1
$region0: #{tpu_custom_call.1}
  #allocation0 [shape = 'u32[]', space=smem, size = 0x4, offset = 0x4, fixed_abs, tag = 'smem constant byte address 0x4 - core index']
  #allocation1 [shape = 'u32[144,128]{1,0:T(1,128)}', space=vmem, size = 0x12000, scoped, tag = 'internal scratch']
  %s0 = inlined_call_operand.hbm [shape: f32[8,128], index: 0, kind: input, shape index: {}]
  %s1 = inlined_call_operand.hbm [shape: f32[8,128], index: 1, kind: output, shape index: {}]
  %s2 = sld [smem:[#allocation0]]
  $region18: #{tpu_custom_call.1} parent=0
    _
  %s4 = ssub.s32 1, %s2
  %s5 = scalar_select 0, %s4, %s2
  $region1: #{tpu_custom_call.1} parent=0
    #allocation2 [shape = 'u8[4096]{0}', space=vmem, size = 0x1000, scoped, tag = 'input window, operand 0, single buffered']
    #allocation3 [shape = 's32[1]{0}', space=sflag, size = 0x4, scoped, tag = 'scoped memory for tpu_custom_call.1']
    #allocation4 [shape = 's32[1]{0}', space=sflag, size = 0x4, scoped, tag = 'scoped memory for tpu_custom_call.1']
    #allocation5 [shape = 'u8[4096]{0}', space=vmem, size = 0x1000, scoped, tag = 'output window, operand 0, single buffered']
    %6 = vsyncpa [#allocation3], 0
    %7 = vsyncpa [#allocation4], 0
    // Predicated region
    $region2: #{tpu_custom_call.1} parent=1 // pred_check
      _
    $region3: #{tpu_custom_call.1} parent=1 // pred_check_branch
      %9 = sbr.rel (0) target = $region5
    $region4: #{tpu_custom_call.1} parent=1 // pred_region
      %s11 = ssub.s32 128, 128
      %12 = vsyncadd [#allocation3], %s11
      %s14 = sshll.u32 [#allocation2], 4
      %s15 = int_to_ptr.vmem [resolvable:$true] %s14
      %17 = dma.hbm_to_vmem [thread:$0]  %s0, 128, %s15, [#allocation3]
    $region5: #{tpu_custom_call.1} parent=1 // pred_fallthru
      _
    // Predicated region
    $region6: #{tpu_custom_call.1} parent=1 // pred_check
      _
    $region7: #{tpu_custom_call.1} parent=1 // pred_check_branch
      %19 = sbr.rel (0) target = $region9
    $region8: #{tpu_custom_call.1} parent=1 // pred_region
      %20 = dma.done [#allocation3], 128
    $region9: #{tpu_custom_call.1} parent=1 // pred_fallthru
      _
    %v21 = vld [vmem:[#allocation2] sm:$0xff]
    %22 = vrot.lane.b32.xlu0 %v21, 1
    %v23 = vpop.permute.xlu0 %22
    %24 = vst [vmem:[#allocation5] sm:$0xff] %v23
    // Predicated region
    $region10: #{tpu_custom_call.1} parent=1 // pred_check
      _
    $region11: #{tpu_custom_call.1} parent=1 // pred_check_branch
      %26 = sbr.rel (0) target = $region13
    $region12: #{tpu_custom_call.1} parent=1 // pred_region
      %s28 = ssub.s32 128, 128
      %29 = vsyncadd [#allocation4], %s28
      %s31 = sshll.u32 [#allocation5], 4
      %s32 = int_to_ptr.vmem [resolvable:$true] %s31
      %34 = dma.vmem_to_hbm [thread:$0]  %s32, 128, %s1, [#allocation4]
    $region13: #{tpu_custom_call.1} parent=1 // pred_fallthru
      _
    // Predicated region
    $region14: #{tpu_custom_call.1} parent=1 // pred_check
      _
    $region15: #{tpu_custom_call.1} parent=1 // pred_check_branch
      %36 = sbr.rel (0) target = $region17
    $region16: #{tpu_custom_call.1} parent=1 // pred_region
      %37 = dma.done [#allocation4], 128
    $region17: #{tpu_custom_call.1} parent=1 // pred_fallthru
      _
    %38 = vsyncpa [#allocation3], 1
    %39 = vsyncpa [#allocation4], 1

</llo_original>
